<compile_context>
chip_gen: v7x
topology: tpu7x:2x2x1
jax: 0.10.0
libtpu: 0.0.40
codegen_flags: <defaults>
</compile_context>

<pallas_src>
import jax
import jax.numpy as jnp
from jax.experimental import pallas as pl
from jax.experimental.pallas import tpu as pltpu


def _make_conv1x1_kernel(n, cin, cout, hw):
    """1x1-conv channel mix on NCHW planes: out[i,co,:] = sum_ci w[co,ci]*x[i,ci,:] + b[co]."""

    def kernel(x_ref, w_ref, b_ref, o_ref):
        # x_ref: (n*cin, hw) f32 VMEM     w_ref: (cout*cin,) f32 SMEM
        # b_ref: (cout,)     f32 SMEM     o_ref: (n*cout, hw) f32 VMEM
        # Hoist all SMEM scalar reads (and their implicit broadcasts) out of the loops.
        wv = [w_ref[k] for k in range(cout * cin)]
        bv = [b_ref[co] for co in range(cout)]

        x = x_ref[...]  # single whole-block load
        rows = []
        for i in range(n):
            for co in range(cout):
                base = i * cin
                acc = x[base:base + 1, :] * wv[co * cin] + bv[co]
                for ci in range(1, cin):
                    acc = acc + x[base + ci:base + ci + 1, :] * wv[co * cin + ci]
                rows.append(acc)  # (1, hw)
        # Single full-block, lane-dense store of all output rows.
        o_ref[...] = jnp.concatenate(rows, axis=0)

    return kernel


def conv1_1x1(x_nchw, w, b):
    """Conv2d(Cin, Cout, kernel_size=1, stride=1, padding=0), NCHW in / NCHW out.

    Accepts the native PyTorch weight shape (Cout, Cin, 1, 1) or a squeezed (Cout, Cin).
    """
    N, C, H, W = x_nchw.shape
    HW = H * W
    in_dtype = x_nchw.dtype

    w2d = jnp.asarray(w, jnp.float32).reshape(w.shape[0], -1)   # (Cout, Cin)
    Cout = w2d.shape[0]
    w_flat = w2d.reshape(Cout * C)                               # 1-D SMEM-friendly
    b_f32 = jnp.asarray(b, jnp.float32).reshape(Cout)

    x_rows = x_nchw.astype(jnp.float32).reshape(N * C, HW)       # pure reshape, no relayout

    flops = 2 * N * Cout * C * HW + N * Cout * HW
    bytes_accessed = 4 * (N * C * HW + N * Cout * HW + Cout * C + Cout)
    cost = pl.CostEstimate(flops=flops, transcendentals=0, bytes_accessed=bytes_accessed)

    o_rows = pl.pallas_call(
        _make_conv1x1_kernel(N, C, Cout, HW),
        out_shape=jax.ShapeDtypeStruct((N * Cout, HW), jnp.float32),
        in_specs=[
            pl.BlockSpec(memory_space=pltpu.MemorySpace.VMEM),   # activations
            pl.BlockSpec(memory_space=pltpu.MemorySpace.SMEM),   # weights (scalars, 1-D)
            pl.BlockSpec(memory_space=pltpu.MemorySpace.SMEM),   # bias (scalars)
        ],
        out_specs=pl.BlockSpec(memory_space=pltpu.MemorySpace.VMEM),
        cost_estimate=cost,
    )(x_rows, w_flat, b_f32)

    return o_rows.reshape(N, Cout, H, W).astype(in_dtype)


@jax.jit
def forward(x1, params):
    w1, b1, w2, b2 = params
    # conv2 / t1 / t2 are dead in the reference module (forward returns only v1).
    # TODO(synk): t2 = v2 + x1 is an invalid broadcast ((N,4,Ho,Wo) + (N,3,H,W)) and
    # raises in PyTorch eager; it has no valid semantics to translate.
    del w2, b2
    return conv1_1x1(x1, w1, b1)


if __name__ == "__main__":
    key = jax.random.PRNGKey(0)
    k_x, k_w1, k_b1, k_w2, k_b2 = jax.random.split(key, 5)

    # Small shapes consistent with the module: N=2, Cin=3, 16x16 spatial.
    x1 = jax.random.normal(k_x, (2, 3, 16, 16), dtype=jnp.float32)

    # PyTorch-native parameter shapes for conv1 (Cout, Cin, 1, 1).
    s1 = 1.0 / jnp.sqrt(3.0)   # conv1 fan_in = 3*1*1
    w1 = jax.random.uniform(k_w1, (2, 3, 1, 1), jnp.float32, -s1, s1)
    b1 = jax.random.uniform(k_b1, (2,), jnp.float32, -s1, s1)
    s2 = 1.0 / jnp.sqrt(2.0)   # conv2 fan_in = 2*1*1 (unused: dead path)
    w2 = jax.random.uniform(k_w2, (2, 4, 1, 1), jnp.float32, -s2, s2)
    b2 = jax.random.uniform(k_b2, (4,), jnp.float32, -s2, s2)
    params = (w1, b1, w2, b2)

    v1 = jax.block_until_ready(forward(x1, params))

    # Cross-check the Pallas 1x1 conv against a plain-JAX reference.
    v1_ref = jnp.einsum("nchw,oc->nohw", x1, w1.reshape(2, 3)) + b1.reshape(1, -1, 1, 1)
    assert v1.shape == (2, 2, 16, 16) and v1.dtype == jnp.float32
    assert jnp.allclose(v1, v1_ref, atol=1e-5, rtol=1e-5)

    print("KERNEL_OK")
</pallas_src>

<mosaic_0001>
module attributes {stable_mosaic.version = 11 : i64} {
  func.func @kernel(%arg0: memref<6x256xf32, #tpu.memory_space<vmem>>, %arg1: memref<6xf32, #tpu.memory_space<smem>>, %arg2: memref<2xf32, #tpu.memory_space<smem>>, %arg3: memref<4x256xf32, #tpu.memory_space<vmem>>) attributes {dimension_semantics = [], scalar_prefetch = 0 : i64, scratch_operands = 0 : i64, tpu.core_type = #tpu.core_type<tc>} {
    %c0 = arith.constant 0 : index
    %0 = memref.load %arg1[%c0] : memref<6xf32, #tpu.memory_space<smem>>
    %c1 = arith.constant 1 : index
    %1 = memref.load %arg1[%c1] : memref<6xf32, #tpu.memory_space<smem>>
    %c2 = arith.constant 2 : index
    %2 = memref.load %arg1[%c2] : memref<6xf32, #tpu.memory_space<smem>>
    %c3 = arith.constant 3 : index
    %3 = memref.load %arg1[%c3] : memref<6xf32, #tpu.memory_space<smem>>
    %c4 = arith.constant 4 : index
    %4 = memref.load %arg1[%c4] : memref<6xf32, #tpu.memory_space<smem>>
    %c5 = arith.constant 5 : index
    %5 = memref.load %arg1[%c5] : memref<6xf32, #tpu.memory_space<smem>>
    %c0_0 = arith.constant 0 : index
    %6 = memref.load %arg2[%c0_0] : memref<2xf32, #tpu.memory_space<smem>>
    %c1_1 = arith.constant 1 : index
    %7 = memref.load %arg2[%c1_1] : memref<2xf32, #tpu.memory_space<smem>>
    %c0_2 = arith.constant 0 : index
    %c0_3 = arith.constant 0 : index
    %8 = vector.load %arg0[%c0_2, %c0_3] : memref<6x256xf32, #tpu.memory_space<vmem>>, vector<6x256xf32>
    %9 = vector.extract_strided_slice %8 {offsets = [0, 0], sizes = [1, 256], strides = [1, 1]} : vector<6x256xf32> to vector<1x256xf32>
    %10 = vector.broadcast %0 : f32 to vector<1x256xf32>
    %11 = arith.mulf %9, %10 : vector<1x256xf32>
    %12 = vector.broadcast %6 : f32 to vector<1x256xf32>
    %13 = arith.addf %11, %12 : vector<1x256xf32>
    %14 = vector.extract_strided_slice %8 {offsets = [1, 0], sizes = [1, 256], strides = [1, 1]} : vector<6x256xf32> to vector<1x256xf32>
    %15 = vector.broadcast %1 : f32 to vector<1x256xf32>
    %16 = arith.mulf %14, %15 : vector<1x256xf32>
    %17 = arith.addf %13, %16 : vector<1x256xf32>
    %18 = vector.extract_strided_slice %8 {offsets = [2, 0], sizes = [1, 256], strides = [1, 1]} : vector<6x256xf32> to vector<1x256xf32>
    %19 = vector.broadcast %2 : f32 to vector<1x256xf32>
    %20 = arith.mulf %18, %19 : vector<1x256xf32>
    %21 = arith.addf %17, %20 : vector<1x256xf32>
    %22 = vector.extract_strided_slice %8 {offsets = [0, 0], sizes = [1, 256], strides = [1, 1]} : vector<6x256xf32> to vector<1x256xf32>
    %23 = vector.broadcast %3 : f32 to vector<1x256xf32>
    %24 = arith.mulf %22, %23 : vector<1x256xf32>
    %25 = vector.broadcast %7 : f32 to vector<1x256xf32>
    %26 = arith.addf %24, %25 : vector<1x256xf32>
    %27 = vector.extract_strided_slice %8 {offsets = [1, 0], sizes = [1, 256], strides = [1, 1]} : vector<6x256xf32> to vector<1x256xf32>
    %28 = vector.broadcast %4 : f32 to vector<1x256xf32>
    %29 = arith.mulf %27, %28 : vector<1x256xf32>
    %30 = arith.addf %26, %29 : vector<1x256xf32>
    %31 = vector.extract_strided_slice %8 {offsets = [2, 0], sizes = [1, 256], strides = [1, 1]} : vector<6x256xf32> to vector<1x256xf32>
    %32 = vector.broadcast %5 : f32 to vector<1x256xf32>
    %33 = arith.mulf %31, %32 : vector<1x256xf32>
    %34 = arith.addf %30, %33 : vector<1x256xf32>
    %35 = vector.extract_strided_slice %8 {offsets = [3, 0], sizes = [1, 256], strides = [1, 1]} : vector<6x256xf32> to vector<1x256xf32>
    %36 = vector.broadcast %0 : f32 to vector<1x256xf32>
    %37 = arith.mulf %35, %36 : vector<1x256xf32>
    %38 = vector.broadcast %6 : f32 to vector<1x256xf32>
    %39 = arith.addf %37, %38 : vector<1x256xf32>
    %40 = vector.extract_strided_slice %8 {offsets = [4, 0], sizes = [1, 256], strides = [1, 1]} : vector<6x256xf32> to vector<1x256xf32>
    %41 = vector.broadcast %1 : f32 to vector<1x256xf32>
    %42 = arith.mulf %40, %41 : vector<1x256xf32>
    %43 = arith.addf %39, %42 : vector<1x256xf32>
    %44 = vector.extract_strided_slice %8 {offsets = [5, 0], sizes = [1, 256], strides = [1, 1]} : vector<6x256xf32> to vector<1x256xf32>
    %45 = vector.broadcast %2 : f32 to vector<1x256xf32>
    %46 = arith.mulf %44, %45 : vector<1x256xf32>
    %47 = arith.addf %43, %46 : vector<1x256xf32>
    %48 = vector.extract_strided_slice %8 {offsets = [3, 0], sizes = [1, 256], strides = [1, 1]} : vector<6x256xf32> to vector<1x256xf32>
    %49 = vector.broadcast %3 : f32 to vector<1x256xf32>
    %50 = arith.mulf %48, %49 : vector<1x256xf32>
    %51 = vector.broadcast %7 : f32 to vector<1x256xf32>
    %52 = arith.addf %50, %51 : vector<1x256xf32>
    %53 = vector.extract_strided_slice %8 {offsets = [4, 0], sizes = [1, 256], strides = [1, 1]} : vector<6x256xf32> to vector<1x256xf32>
    %54 = vector.broadcast %4 : f32 to vector<1x256xf32>
    %55 = arith.mulf %53, %54 : vector<1x256xf32>
    %56 = arith.addf %52, %55 : vector<1x256xf32>
    %57 = vector.extract_strided_slice %8 {offsets = [5, 0], sizes = [1, 256], strides = [1, 1]} : vector<6x256xf32> to vector<1x256xf32>
    %58 = vector.broadcast %5 : f32 to vector<1x256xf32>
    %59 = arith.mulf %57, %58 : vector<1x256xf32>
    %60 = arith.addf %56, %59 : vector<1x256xf32>
    %61 = tpu.concatenate %21, %34, %47, %60 in 0 : vector<1x256xf32>, vector<1x256xf32>, vector<1x256xf32>, vector<1x256xf32> -> vector<4x256xf32>
    %c0_4 = arith.constant 0 : index
    %c0_5 = arith.constant 0 : index
    %62 = vector.load %arg3[%c0_4, %c0_5] : memref<4x256xf32, #tpu.memory_space<vmem>>, vector<4x256xf32>
    tpu.vector_store %arg3[%c0_4, %c0_5], %61 {strides = array<i32>} : memref<4x256xf32, #tpu.memory_space<vmem>>, vector<4x256xf32>,
    return
  }
}

</mosaic_0001>

<llo_original>
// kernel: forward.1
$region0: #{forward.1}
  #allocation0 [shape = 'u32[]', space=smem, size = 0x4, offset = 0x4, fixed_abs, tag = 'smem constant byte address 0x4 - core index']
  #allocation1 [shape = 'u32[144,128]{1,0:T(1,128)}', space=vmem, size = 0x12000, scoped, tag = 'internal scratch']
  %s0 = inlined_call_operand.vmem [shape: f32[6,256], index: 0, kind: input, shape index: {}]
  %s1 = inlined_call_operand.vmem [shape: f32[6], index: 1, kind: input, shape index: {}]
  %s2 = inlined_call_operand.vmem [shape: f32[2], index: 2, kind: input, shape index: {}]
  %s3 = inlined_call_operand.vmem [shape: f32[4,256], index: 3, kind: output, shape index: {}]
  %s4 = sld [smem:[#allocation0]]
  $region30: #{forward.1} parent=0
    _
  %s6 = ssub.s32 1, %s4
  %s7 = scalar_select 0, %s6, %s4
  $region1: #{forward.1} parent=0
    #allocation2 [shape = 'u8[512]{0}', space=smem, size = 0x200, scoped, tag = 'input window, operand 1, single buffered']
    #allocation3 [shape = 's32[1]{0}', space=sflag, size = 0x4, scoped, tag = 'scoped memory for forward.1']
    #allocation4 [shape = 'u8[512]{0}', space=smem, size = 0x200, scoped, tag = 'input window, operand 2, single buffered']
    #allocation5 [shape = 's32[1]{0}', space=sflag, size = 0x4, scoped, tag = 'scoped memory for forward.1']
    %8 = vsyncpa [#allocation3], 0
    %9 = vsyncpa [#allocation5], 0
    // Predicated region
    $region2: #{forward.1} parent=1 // pred_check
      _
    $region3: #{forward.1} parent=1 // pred_check_branch
      %11 = sbr.rel (0) target = $region5
    $region4: #{forward.1} parent=1 // pred_region
      _
    $region5: #{forward.1} parent=1 // pred_fallthru
      _
    // Predicated region
    $region6: #{forward.1} parent=1 // pred_check
      _
    $region7: #{forward.1} parent=1 // pred_check_branch
      %13 = sbr.rel (0) target = $region9
    $region8: #{forward.1} parent=1 // pred_region
      %s15 = ssub.s32 16, 16
      %16 = vsyncadd [#allocation3], %s15
      %s18 = sshll.u32 %s1, 4
      %s19 = int_to_ptr.vmem [resolvable:$true] %s18
      %21 = dma.vmem_to_smem %s19, 16, [#allocation2], [#allocation3]
    $region9: #{forward.1} parent=1 // pred_fallthru
      _
    // Predicated region
    $region10: #{forward.1} parent=1 // pred_check
      _
    $region11: #{forward.1} parent=1 // pred_check_branch
      %23 = sbr.rel (0) target = $region13
    $region12: #{forward.1} parent=1 // pred_region
      %s25 = ssub.s32 16, 16
      %26 = vsyncadd [#allocation5], %s25
      %s28 = sshll.u32 %s2, 4
      %s29 = int_to_ptr.vmem [resolvable:$true] %s28
      %31 = dma.vmem_to_smem %s29, 16, [#allocation4], [#allocation5]
    $region13: #{forward.1} parent=1 // pred_fallthru
      _
    // Predicated region
    $region14: #{forward.1} parent=1 // pred_check
      _
    $region15: #{forward.1} parent=1 // pred_check_branch
      %33 = sbr.rel (0) target = $region17
    $region16: #{forward.1} parent=1 // pred_region
      %34 = dma.done [#allocation3], 16
    $region17: #{forward.1} parent=1 // pred_fallthru
      _
    // Predicated region
    $region18: #{forward.1} parent=1 // pred_check
      _
    $region19: #{forward.1} parent=1 // pred_check_branch
      %36 = sbr.rel (0) target = $region21
    $region20: #{forward.1} parent=1 // pred_region
      %37 = dma.done [#allocation5], 16
    $region21: #{forward.1} parent=1 // pred_fallthru
      _
    %38 = sfence
    %s39 = sld [smem:[#allocation2]]
    %s40 = sld [smem:[#allocation2 + $0x1]]
    %s41 = sld [smem:[#allocation2 + $0x2]]
    %s42 = sld [smem:[#allocation2 + $0x3]]
    %s43 = sld [smem:[#allocation2 + $0x4]]
    %s44 = sld [smem:[#allocation2 + $0x5]]
    %s45 = sld [smem:[#allocation4]]
    %s46 = sld [smem:[#allocation4 + $0x1]]
    %v47 = vld [vmem:[%s0] sm:$0x3f]
    %v48 = vld [vmem:[%s0 + $0x8] sm:$0x3f]
    %v49 = vstv %s39
    %v50 = vmul.f32 %v47, %v49
    %v51 = vmul.f32 %v48, %v49
    %v52 = vstv %s45
    %v53 = vadd.f32 %v50, %v52
    %v54 = vadd.f32 %v51, %v52
    %v55 = vstv %s40
    %v56 = vmul.f32 %v47, %v55
    %v57 = vmul.f32 %v48, %v55
    %v60 = vrot.slane %v56, 1
    %v61 = vrot.slane %v57, 1
    %v64 = vadd.f32 %v53, %v60
    %v65 = vadd.f32 %v54, %v61
    %v66 = vstv %s41
    %v67 = vmul.f32 %v47, %v66
    %v68 = vmul.f32 %v48, %v66
    %v71 = vrot.slane %v67, 2
    %v72 = vrot.slane %v68, 2
    %v75 = vadd.f32 %v64, %v71
    %v76 = vadd.f32 %v65, %v72
    %v77 = vstv %s42
    %v78 = vmul.f32 %v47, %v77
    %v79 = vmul.f32 %v48, %v77
    %v80 = vstv %s46
    %v81 = vadd.f32 %v78, %v80
    %v82 = vadd.f32 %v79, %v80
    %v83 = vstv %s43
    %v84 = vmul.f32 %v47, %v83
    %v85 = vmul.f32 %v48, %v83
    %v88 = vrot.slane %v84, 1
    %v89 = vrot.slane %v85, 1
    %v92 = vadd.f32 %v81, %v88
    %v93 = vadd.f32 %v82, %v89
    %v94 = vstv %s44
    %v95 = vmul.f32 %v47, %v94
    %v96 = vmul.f32 %v48, %v94
    %v99 = vrot.slane %v95, 2
    %v100 = vrot.slane %v96, 2
    %v103 = vadd.f32 %v92, %v99
    %v104 = vadd.f32 %v93, %v100
    %v107 = vrot.slane %v103, 7
    %v108 = vrot.slane %v104, 7
    %v113 = vrot.slane %v75, 1
    %v114 = vrot.slane %v76, 1
    %vm117 = vcmask 1040384
    %v118 = vsel %vm117, %v75, %v107
    %v119 = vsel %vm117, %v76, %v108
    %vm120 = vcmask 1041408
    %v121 = vsel %vm120, %v118, %v113
    %v122 = vsel %vm120, %v119, %v114
    %vm123 = vcmask 1042432
    %v124 = vsel %vm123, %v121, %v103
    %v125 = vsel %vm123, %v122, %v104
    %v128 = vcombine.low %v124, %v125
    %130 = vst [vmem:[%s3] sm:$0xff] %v128
    // Predicated region
    $region22: #{forward.1} parent=1 // pred_check
      _
    $region23: #{forward.1} parent=1 // pred_check_branch
      %132 = sbr.rel (0) target = $region25
    $region24: #{forward.1} parent=1 // pred_region
      _
    $region25: #{forward.1} parent=1 // pred_fallthru
      _
    // Predicated region
    $region26: #{forward.1} parent=1 // pred_check
      _
    $region27: #{forward.1} parent=1 // pred_check_branch
      %134 = sbr.rel (0) target = $region29
    $region28: #{forward.1} parent=1 // pred_region
      _
    $region29: #{forward.1} parent=1 // pred_fallthru
      _
    %135 = vsyncpa [#allocation3], 1
    %136 = vsyncpa [#allocation5], 1

</llo_original>
